<compile_context>
chip_gen: v6e
topology: v6e:2x2x1
jax: 0.10.0
libtpu: 0.0.40
codegen_flags: <defaults>
</compile_context>

<pallas_src>
import functools

import jax
import jax.numpy as jnp
from jax.experimental import pallas as pl
from jax.experimental.pallas import tpu as pltpu

TOP_K = 5          # assumed default top_k of SparseAttention()
SPARSE_EPS = 1e-7  # 10e-8 in the reference
_LANE = 128
_SUBLANE = 8
_NEG_I32 = jnp.iinfo(jnp.int32).min


def _round_up(x, m):
    return ((x + m - 1) // m) * m


def _vmem_capacity_bytes():
    try:
        return int(pltpu.get_tpu_info().vmem_capacity_bytes)
    except Exception:
        return 64 * 1024 * 1024          # conservative (v7x-sized) fallback


def _device_kind():
    try:
        return jax.devices()[0].device_kind.lower()
    except Exception:
        return ""


def _pick_q_tile(nq, nk, vmem_bytes, device_kind):
    """Query-tile rows: fill the MXU, but respect the part's VMEM."""
    if nq <= _SUBLANE:
        return _SUBLANE
    if nq < 128:
        return _round_up(nq, _SUBLANE)
    tq = 128
    # v6e/v7x have a 256x256 MXU; TQ=256 fills it (v5e's 128x128 is full at 128).
    if nq >= 256 and "v5" not in device_kind:
        tq = 256
    # Back off when the live (TQ, Nk) f32 temporaries would crowd VMEM
    # (matters for large Nk on v7x's 64 MiB parts).
    while tq > 32 and 6 * tq * nk * 4 > vmem_bytes // 4:
        tq //= 2
    return tq


def _sdp_attn_kernel(q_ref, kt_ref, v_ref, out_ref, *attn_refs,
                     temperature, top_k, apply_sparse, col_bits):
    q = q_ref[0]          # (TQ, Dk)   native dtype -> MXU at full rate
    kt = kt_ref[0]        # (Dk, Nk)   pre-transposed in the wrapper (no XLU transpose)
    v = v_ref[0]          # (Nk, Dv_p) lane-padded in the wrapper (zeros)

    tq = q.shape[0]
    nk = kt.shape[1]

    # scores = (q / temperature) @ k^T ; scale after the matmul in f32
    # (equivalent, keeps the MXU operands in their native dtype).
    scores = jnp.dot(q, kt, preferred_element_type=jnp.float32)
    scores = scores * jnp.float32(1.0 / temperature)

    # Row-wise softmax statistics; exp / reciprocal go to the EUP.
    m = jnp.max(scores, axis=-1, keepdims=True)
    e = jnp.exp(scores - m)                               # e in (0, 1], max per row == 1
    denom = jnp.sum(e, axis=-1, keepdims=True)
    recip_denom = pl.reciprocal(denom, approx=True)

    if apply_sparse:
        # SparseAttention: delta = (top_k-th largest attn per row) + eps,
        #   w = clamp(attn - delta, 0), attn = w / (sum(w) + eps).
        # Thresholding is done directly in e-space (attn = e/denom is monotone in e),
        # so the dense pre-sparse attn array is never materialized.
        # Selection uses packed int32 keys:
        #   key = (e bits with the low col_bits zeroed) | (col_mask - col)
        # Keys are unique per column, so masking the row max removes exactly one
        # occurrence per step (matches torch.topk duplicate handling); the k-th e
        # value is reconstructed from the surviving key's high bits (truncation
        # error <= 2^-(23 - col_bits) relative -- negligible up to Nk of a few K).
        col = jax.lax.broadcasted_iota(jnp.int32, (tq, nk), 1)
        col_mask = (1 << col_bits) - 1
        e_bits = pltpu.bitcast(e, jnp.int32)              # e >= 0 -> order-preserving
        keys = ((e_bits >> col_bits) << col_bits) | (col_mask - col)
        # `col` is dead from here on; `keys` is the only full-width i32 live value.
        # TODO(synk): hierarchical per-chunk candidate selection for very large Nk.
        for _ in range(top_k - 1):
            kmax = jnp.max(keys, axis=-1, keepdims=True)
            keys = jnp.where(keys == kmax, jnp.int32(_NEG_I32), keys)
        kth_key = jnp.max(keys, axis=-1, keepdims=True)
        kth_e = pltpu.bitcast((kth_key >> col_bits) << col_bits, jnp.float32)

        # w = max(attn - delta, 0) = max((e - e_k)/denom - eps, 0)
        w = jnp.maximum((e - kth_e) * recip_denom - jnp.float32(SPARSE_EPS),
                        jnp.float32(0.0))
        wsum = jnp.sum(w, axis=-1, keepdims=True) + jnp.float32(SPARSE_EPS)
        # Exact reciprocal for the final (returned) normalization.
        attn = w * pl.reciprocal(wsum, approx=False)
    else:
        attn = e * recip_denom

    # out = attn @ v ; cast attn to v.dtype (flash-attn style) so bf16 inputs keep
    # the MXU at full rate, accumulate in f32.  V's lane padding is zero, so the
    # padded out columns are exactly zero and the store stays unmasked/lane-dense.
    # TODO(synk): for very large Nk, gather the <= top_k nonzero value rows per
    # query instead of this dense second matmul.
    out = jnp.dot(attn.astype(v.dtype), v, preferred_element_type=jnp.float32)
    out_ref[0] = out.astype(out_ref.dtype)
    if attn_refs:
        attn_refs[0][0] = attn.astype(attn_refs[0].dtype)


def scaled_dot_product_attention(q, k, v, temperature, top_k=TOP_K,
                                 return_attn=True, attn_dtype=None,
                                 compute_dtype=None, q_tile=None):
    """q: (B, Nq, Dk), k: (B, Nk, Dk), v: (B, Nk, Dv) -> (out, attn) or out.

    return_attn=False skips the attn HBM writeback entirely (it is the largest
    output of this kernel); attn_dtype=jnp.bfloat16 halves it when it must be
    returned.  compute_dtype=jnp.bfloat16 casts the MXU operands in the wrapper
    (f32 accumulation is kept); the output stays in the original q.dtype.
    """
    B, Nq, Dk = q.shape
    _, Nk, _ = k.shape
    Dv = v.shape[-1]
    out_dtype = q.dtype
    apply_sparse = Nk > top_k   # SparseAttention is a pass-through when outs <= top_k

    if compute_dtype is not None:
        q = q.astype(compute_dtype)
        k = k.astype(compute_dtype)
        v = v.astype(compute_dtype)

    # ---- wrapper-side layout plumbing (no padded HBM copies of q / k) ----
    kt = jnp.swapaxes(k, 1, 2)                       # (B, Dk, Nk)
    Dv_p = _round_up(Dv, _LANE)                      # lane-dense output stores
    v_in = v if Dv_p == Dv else jnp.pad(v, ((0, 0), (0, 0), (0, Dv_p - Dv)))

    vmem_bytes = _vmem_capacity_bytes()
    TQ = int(q_tile) if q_tile is not None else _pick_q_tile(
        Nq, Nk, vmem_bytes, _device_kind())
    col_bits = max((Nk - 1).bit_length(), 1)

    kernel = functools.partial(
        _sdp_attn_kernel,
        temperature=float(temperature),
        top_k=int(top_k),
        apply_sparse=bool(apply_sparse),
        col_bits=int(col_bits),
    )

    grid = (B, pl.cdiv(Nq, TQ))
    in_specs = [
        pl.BlockSpec((1, TQ, Dk), lambda b, i: (b, i, 0)),     # q (partial last tile OK)
        pl.BlockSpec((1, Dk, Nk), lambda b, i: (b, 0, 0)),     # k^T, re-DMA'd only per batch
        pl.BlockSpec((1, Nk, Dv_p), lambda b, i: (b, 0, 0)),   # v,   re-DMA'd only per batch
    ]
    out_specs = [pl.BlockSpec((1, TQ, Dv_p), lambda b, i: (b, i, 0))]
    out_shape = [jax.ShapeDtypeStruct((B, Nq, Dv_p), out_dtype)]
    if return_attn:
        out_specs.append(pl.BlockSpec((1, TQ, Nk), lambda b, i: (b, i, 0)))
        out_shape.append(jax.ShapeDtypeStruct(
            (B, Nq, Nk), attn_dtype if attn_dtype is not None else out_dtype))

    # Megacore split on the batch axis: q tiles of one batch share K^T / V, so
    # splitting them across cores would double the K/V DMA traffic (v7x).
    dim_sem = ("parallel", "parallel") if B == 1 else ("parallel", "arbitrary")

    results = pl.pallas_call(
        kernel,
        grid=grid,
        in_specs=in_specs,
        out_specs=out_specs,
        out_shape=out_shape,
        compiler_params=pltpu.CompilerParams(
            dimension_semantics=dim_sem,
            vmem_limit_bytes=int(vmem_bytes * 3 // 4),  # 96 MiB v5e/v6e, 48 MiB v7x
        ),
    )(q, kt, v_in)

    out = results[0] if Dv_p == Dv else results[0][:, :, :Dv]
    if return_attn:
        return out, results[1]
    return out


def _reference(q, k, v, temperature, top_k=TOP_K):
    """Plain-JAX reference of the same forward (eval mode)."""
    attn = jnp.einsum("bqd,bkd->bqk", q / temperature, k)
    attn = jax.nn.softmax(attn, axis=-1)
    mb, ins, outs = attn.shape
    a = attn.reshape(mb * ins, outs)
    if outs > top_k:
        kth = jax.lax.top_k(a, top_k)[0][:, -1:] + SPARSE_EPS
        w = jnp.clip(a - kth, 0.0, None)
        a = w / (jnp.sum(w, axis=1, keepdims=True) + SPARSE_EPS)
    attn = a.reshape(mb, ins, outs)
    out = jnp.einsum("bqk,bkd->bqd", attn, v)
    return out, attn


def _check(out, attn, ref_out, ref_attn, atol, rtol, tag):
    assert out.shape == ref_out.shape, (tag, out.shape, ref_out.shape)
    err_o = float(jnp.max(jnp.abs(out - ref_out)))
    assert jnp.allclose(out, ref_out, atol=atol, rtol=rtol), (tag, "out", err_o)
    if attn is not None:
        assert attn.shape == ref_attn.shape, (tag, attn.shape, ref_attn.shape)
        a32 = attn.astype(jnp.float32)
        err_a = float(jnp.max(jnp.abs(a32 - ref_attn)))
        assert jnp.allclose(a32, ref_attn, atol=atol, rtol=rtol), (tag, "attn", err_a)


if __name__ == "__main__":
    key = jax.random.PRNGKey(0)
    k1, k2, k3 = jax.random.split(key, 3)

    # Case 1: shapes implied by the module (batch=2, seq=8/16, hidden=32).
    kq, kk, kv = jax.random.split(k1, 3)
    q = jax.random.normal(kq, (2, 8, 32), jnp.float32)
    k = jax.random.normal(kk, (2, 16, 32), jnp.float32)
    v = jax.random.normal(kv, (2, 16, 32), jnp.float32)
    t = float(32) ** 0.5
    out, attn = scaled_dot_product_attention(q, k, v, t)
    jax.block_until_ready((out, attn))
    ro, ra = _reference(q, k, v, t)
    _check(out, attn, ro, ra, 3e-3, 3e-3, "case1")

    # Case 2: exercises q tiling (partial last tile) and the Dv lane-padding path.
    kq, kk, kv = jax.random.split(k2, 3)
    q = jax.random.normal(kq, (2, 160, 48), jnp.float32)
    k = jax.random.normal(kk, (2, 96, 48), jnp.float32)
    v = jax.random.normal(kv, (2, 96, 80), jnp.float32)
    t = float(48) ** 0.5
    out, attn = scaled_dot_product_attention(q, k, v, t)
    jax.block_until_ready((out, attn))
    ro, ra = _reference(q, k, v, t)
    _check(out, attn, ro, ra, 3e-3, 3e-3, "case2")

    # Case 3: perf path -- bf16 MXU operands, attn HBM writeback skipped.
    kq, kk, kv = jax.random.split(k3, 3)
    q = jax.random.normal(kq, (2, 64, 32), jnp.float32)
    k = jax.random.normal(kk, (2, 64, 32), jnp.float32)
    v = jax.random.normal(kv, (2, 64, 32), jnp.float32)
    t = float(32) ** 0.5
    out = scaled_dot_product_attention(q, k, v, t, return_attn=False,
                                       compute_dtype=jnp.bfloat16)
    jax.block_until_ready(out)
    qb = q.astype(jnp.bfloat16).astype(jnp.float32)
    kb = k.astype(jnp.bfloat16).astype(jnp.float32)
    vb = v.astype(jnp.bfloat16).astype(jnp.float32)
    ro, _ = _reference(qb, kb, vb, t)
    _check(out, None, ro, None, 3e-2, 3e-2, "case3-bf16")

    print("KERNEL_OK")
</pallas_src>

<mosaic_0001>
module attributes {stable_mosaic.version = 11 : i64} {
  func.func @_sdp_attn_kernel(%arg0: i32, %arg1: i32, %arg2: memref<1x8x32xf32, #tpu.memory_space<vmem>>, %arg3: memref<1x32x16xf32, #tpu.memory_space<vmem>>, %arg4: memref<1x16x128xf32, #tpu.memory_space<vmem>>, %arg5: memref<1x8x128xf32, #tpu.memory_space<vmem>>, %arg6: memref<1x8x16xf32, #tpu.memory_space<vmem>>) attributes {dimension_semantics = [#tpu.dimension_semantics<parallel>, #tpu.dimension_semantics<arbitrary>], iteration_bounds = array<i64: 2, 1>, scalar_prefetch = 0 : i64, scratch_operands = 0 : i64, tpu.core_type = #tpu.core_type<tc>, window_params = [{transform_indices = @transform_0, window_bounds = array<i64: 1, 8, 32>}, {transform_indices = @transform_1, window_bounds = array<i64: 1, 32, 16>}, {transform_indices = @transform_2, window_bounds = array<i64: 1, 16, 128>}, {transform_indices = @transform_3, window_bounds = array<i64: 1, 8, 128>}, {transform_indices = @transform_4, window_bounds = array<i64: 1, 8, 16>}]} {
    %c0 = arith.constant 0 : index
    %c0_0 = arith.constant 0 : index
    %c0_1 = arith.constant 0 : index
    %0 = vector.load %arg2[%c0, %c0_0, %c0_1] : memref<1x8x32xf32, #tpu.memory_space<vmem>>, vector<1x8x32xf32>
    %1 = vector.shape_cast %0 : vector<1x8x32xf32> to vector<8x32xf32>
    %c0_2 = arith.constant 0 : index
    %c0_3 = arith.constant 0 : index
    %c0_4 = arith.constant 0 : index
    %2 = vector.load %arg3[%c0_2, %c0_3, %c0_4] : memref<1x32x16xf32, #tpu.memory_space<vmem>>, vector<1x32x16xf32>
    %3 = vector.shape_cast %2 : vector<1x32x16xf32> to vector<32x16xf32>
    %c0_5 = arith.constant 0 : index
    %c0_6 = arith.constant 0 : index
    %c0_7 = arith.constant 0 : index
    %4 = vector.load %arg4[%c0_5, %c0_6, %c0_7] : memref<1x16x128xf32, #tpu.memory_space<vmem>>, vector<1x16x128xf32>
    %5 = vector.shape_cast %4 : vector<1x16x128xf32> to vector<16x128xf32>
    %cst = arith.constant dense<0.000000e+00> : vector<8x16xf32>
    %6 = tpu.matmul %1, %3, %cst {dimension_numbers = #tpu.dot_dimension_numbers<[1], [0], [0], [1], [0, 0, 1, 1], [], []>} : vector<8x32xf32>, vector<32x16xf32>, vector<8x16xf32> -> vector<8x16xf32>
    %cst_8 = arith.constant 0.176776692 : f32
    %7 = vector.broadcast %cst_8 : f32 to vector<8x16xf32>
    %8 = arith.mulf %6, %7 : vector<8x16xf32>
    %cst_9 = arith.constant dense<0xFF800000> : vector<8xf32>
    %9 = vector.multi_reduction <maximumf>, %8, %cst_9 [1] : vector<8x16xf32> to vector<8xf32>
    %10 = vector.shape_cast %9 : vector<8xf32> to vector<8x1xf32>
    %11 = vector.broadcast %10 : vector<8x1xf32> to vector<8x16xf32>
    %12 = arith.subf %8, %11 : vector<8x16xf32>
    %13 = math.exp %12 : vector<8x16xf32>
    %cst_10 = arith.constant dense<0.000000e+00> : vector<8xf32>
    %14 = vector.multi_reduction <add>, %13, %cst_10 [1] : vector<8x16xf32> to vector<8xf32>
    %15 = vector.shape_cast %14 : vector<8xf32> to vector<8x1xf32>
    %16 = tpu.reciprocal %15 {approx = true} : vector<8x1xf32> -> vector<8x1xf32>
    %17 = tpu.iota {dimensions = array<i32: 1>} : vector<8x16xi32>
    %18 = tpu.bitcast %13 : vector<8x16xf32> -> vector<8x16xi32>
    %c4_i32 = arith.constant 4 : i32
    %19 = vector.broadcast %c4_i32 : i32 to vector<8x16xi32>
    %20 = arith.shrsi %18, %19 : vector<8x16xi32>
    %c4_i32_11 = arith.constant 4 : i32
    %21 = vector.broadcast %c4_i32_11 : i32 to vector<8x16xi32>
    %22 = arith.shli %20, %21 : vector<8x16xi32>
    %c15_i32 = arith.constant 15 : i32
    %23 = vector.broadcast %c15_i32 : i32 to vector<8x16xi32>
    %24 = arith.subi %23, %17 : vector<8x16xi32>
    %25 = arith.ori %22, %24 : vector<8x16xi32>
    %cst_12 = arith.constant dense<-2147483648> : vector<8xi32>
    %26 = vector.multi_reduction <maxsi>, %25, %cst_12 [1] : vector<8x16xi32> to vector<8xi32>
    %27 = vector.shape_cast %26 : vector<8xi32> to vector<8x1xi32>
    %28 = vector.broadcast %27 : vector<8x1xi32> to vector<8x16xi32>
    %29 = arith.cmpi eq, %25, %28 : vector<8x16xi32>
    %c-2147483648_i32 = arith.constant -2147483648 : i32
    %30 = vector.broadcast %c-2147483648_i32 : i32 to vector<8x16xi32>
    %31 = arith.select %29, %30, %25 : vector<8x16xi1>, vector<8x16xi32>
    %cst_13 = arith.constant dense<-2147483648> : vector<8xi32>
    %32 = vector.multi_reduction <maxsi>, %31, %cst_13 [1] : vector<8x16xi32> to vector<8xi32>
    %33 = vector.shape_cast %32 : vector<8xi32> to vector<8x1xi32>
    %34 = vector.broadcast %33 : vector<8x1xi32> to vector<8x16xi32>
    %35 = arith.cmpi eq, %31, %34 : vector<8x16xi32>
    %c-2147483648_i32_14 = arith.constant -2147483648 : i32
    %36 = vector.broadcast %c-2147483648_i32_14 : i32 to vector<8x16xi32>
    %37 = arith.select %35, %36, %31 : vector<8x16xi1>, vector<8x16xi32>
    %cst_15 = arith.constant dense<-2147483648> : vector<8xi32>
    %38 = vector.multi_reduction <maxsi>, %37, %cst_15 [1] : vector<8x16xi32> to vector<8xi32>
    %39 = vector.shape_cast %38 : vector<8xi32> to vector<8x1xi32>
    %40 = vector.broadcast %39 : vector<8x1xi32> to vector<8x16xi32>
    %41 = arith.cmpi eq, %37, %40 : vector<8x16xi32>
    %c-2147483648_i32_16 = arith.constant -2147483648 : i32
    %42 = vector.broadcast %c-2147483648_i32_16 : i32 to vector<8x16xi32>
    %43 = arith.select %41, %42, %37 : vector<8x16xi1>, vector<8x16xi32>
    %cst_17 = arith.constant dense<-2147483648> : vector<8xi32>
    %44 = vector.multi_reduction <maxsi>, %43, %cst_17 [1] : vector<8x16xi32> to vector<8xi32>
    %45 = vector.shape_cast %44 : vector<8xi32> to vector<8x1xi32>
    %46 = vector.broadcast %45 : vector<8x1xi32> to vector<8x16xi32>
    %47 = arith.cmpi eq, %43, %46 : vector<8x16xi32>
    %c-2147483648_i32_18 = arith.constant -2147483648 : i32
    %48 = vector.broadcast %c-2147483648_i32_18 : i32 to vector<8x16xi32>
    %49 = arith.select %47, %48, %43 : vector<8x16xi1>, vector<8x16xi32>
    %cst_19 = arith.constant dense<-2147483648> : vector<8xi32>
    %50 = vector.multi_reduction <maxsi>, %49, %cst_19 [1] : vector<8x16xi32> to vector<8xi32>
    %51 = vector.shape_cast %50 : vector<8xi32> to vector<8x1xi32>
    %c4_i32_20 = arith.constant 4 : i32
    %52 = vector.broadcast %c4_i32_20 : i32 to vector<8x1xi32>
    %53 = arith.shrsi %51, %52 : vector<8x1xi32>
    %c4_i32_21 = arith.constant 4 : i32
    %54 = vector.broadcast %c4_i32_21 : i32 to vector<8x1xi32>
    %55 = arith.shli %53, %54 : vector<8x1xi32>
    %56 = tpu.bitcast %55 : vector<8x1xi32> -> vector<8x1xf32>
    %57 = vector.broadcast %56 : vector<8x1xf32> to vector<8x16xf32>
    %58 = arith.subf %13, %57 : vector<8x16xf32>
    %59 = vector.broadcast %16 : vector<8x1xf32> to vector<8x16xf32>
    %60 = arith.mulf %58, %59 : vector<8x16xf32>
    %cst_22 = arith.constant 1.000000e-07 : f32
    %61 = vector.broadcast %cst_22 : f32 to vector<8x16xf32>
    %62 = arith.subf %60, %61 : vector<8x16xf32>
    %cst_23 = arith.constant 0.000000e+00 : f32
    %63 = vector.broadcast %cst_23 : f32 to vector<8x16xf32>
    %64 = arith.maximumf %62, %63 : vector<8x16xf32>
    %cst_24 = arith.constant dense<0.000000e+00> : vector<8xf32>
    %65 = vector.multi_reduction <add>, %64, %cst_24 [1] : vector<8x16xf32> to vector<8xf32>
    %66 = vector.shape_cast %65 : vector<8xf32> to vector<8x1xf32>
    %cst_25 = arith.constant 1.000000e-07 : f32
    %67 = vector.broadcast %cst_25 : f32 to vector<8x1xf32>
    %68 = arith.addf %66, %67 : vector<8x1xf32>
    %69 = tpu.reciprocal %68 : vector<8x1xf32> -> vector<8x1xf32>
    %70 = vector.broadcast %69 : vector<8x1xf32> to vector<8x16xf32>
    %71 = arith.mulf %64, %70 : vector<8x16xf32>
    %cst_26 = arith.constant dense<0.000000e+00> : vector<8x128xf32>
    %72 = tpu.matmul %71, %5, %cst_26 {dimension_numbers = #tpu.dot_dimension_numbers<[1], [0], [0], [1], [0, 0, 1, 1], [], []>} : vector<8x16xf32>, vector<16x128xf32>, vector<8x128xf32> -> vector<8x128xf32>
    %c0_27 = arith.constant 0 : index
    %c0_28 = arith.constant 0 : index
    %c0_29 = arith.constant 0 : index
    %73 = vector.load %arg5[%c0_27, %c0_28, %c0_29] : memref<1x8x128xf32, #tpu.memory_space<vmem>>, vector<1x8x128xf32>
    %74 = vector.shape_cast %73 : vector<1x8x128xf32> to vector<8x128xf32>
    %75 = vector.shape_cast %72 : vector<8x128xf32> to vector<1x8x128xf32>
    tpu.vector_store %arg5[%c0_27, %c0_28, %c0_29], %75 {strides = array<i32>} : memref<1x8x128xf32, #tpu.memory_space<vmem>>, vector<1x8x128xf32>,
    %c0_30 = arith.constant 0 : index
    %c0_31 = arith.constant 0 : index
    %c0_32 = arith.constant 0 : index
    %76 = vector.load %arg6[%c0_30, %c0_31, %c0_32] : memref<1x8x16xf32, #tpu.memory_space<vmem>>, vector<1x8x16xf32>
    %77 = vector.shape_cast %76 : vector<1x8x16xf32> to vector<8x16xf32>
    %78 = vector.shape_cast %71 : vector<8x16xf32> to vector<1x8x16xf32>
    tpu.vector_store %arg6[%c0_30, %c0_31, %c0_32], %78 {strides = array<i32>} : memref<1x8x16xf32, #tpu.memory_space<vmem>>, vector<1x8x16xf32>,
    return
  }
  func.func @transform_0(%arg0: i32, %arg1: i32) -> (i32, i32, i32) {
    %c0_i32 = arith.constant 0 : i32
    %c0_i32_0 = arith.constant 0 : i32
    return %arg0, %arg1, %c0_i32 : i32, i32, i32
  }
  func.func @transform_1(%arg0: i32, %arg1: i32) -> (i32, i32, i32) {
    %c0_i32 = arith.constant 0 : i32
    %c0_i32_0 = arith.constant 0 : i32
    %c0_i32_1 = arith.constant 0 : i32
    return %arg0, %c0_i32, %c0_i32_0 : i32, i32, i32
  }
  func.func @transform_2(%arg0: i32, %arg1: i32) -> (i32, i32, i32) {
    %c0_i32 = arith.constant 0 : i32
    %c0_i32_0 = arith.constant 0 : i32
    %c0_i32_1 = arith.constant 0 : i32
    return %arg0, %c0_i32, %c0_i32_0 : i32, i32, i32
  }
  func.func @transform_3(%arg0: i32, %arg1: i32) -> (i32, i32, i32) {
    %c0_i32 = arith.constant 0 : i32
    %c0_i32_0 = arith.constant 0 : i32
    return %arg0, %arg1, %c0_i32 : i32, i32, i32
  }
  func.func @transform_4(%arg0: i32, %arg1: i32) -> (i32, i32, i32) {
    %c0_i32 = arith.constant 0 : i32
    %c0_i32_0 = arith.constant 0 : i32
    return %arg0, %arg1, %c0_i32 : i32, i32, i32
  }
}

</mosaic_0001>

<llo_original>
// kernel: tpu_custom_call.1
$region0: #{tpu_custom_call.1}
  #allocation0 [shape = 'u32[]', space=smem, size = 0x4, offset = 0x4, fixed_abs, tag = 'smem constant byte address 0x4 - core index']
  #allocation1 [shape = 'u32[144,128]{1,0:T(1,128)}', space=vmem, size = 0x12000, scoped, tag = 'internal scratch']
  %s0 = inlined_call_operand.vmem [shape: f32[2,8,32], index: 0, kind: input, shape index: {}]
  %s1 = inlined_call_operand.vmem [shape: f32[2,32,16], index: 1, kind: input, shape index: {}]
  %s2 = inlined_call_operand.vmem [shape: f32[2,16,128], index: 2, kind: input, shape index: {}]
  %s3 = inlined_call_operand.hbm [shape: f32[2,8,128], index: 3, kind: output, shape index: {0}]
  %s4 = inlined_call_operand.hbm [shape: f32[2,8,16], index: 4, kind: output, shape index: {1}]
  %5 = xla_tuple %s3, %s4
  %s6 = sld [smem:[#allocation0]]
  $region53: #{tpu_custom_call.1} parent=0
    _
  %s8 = ssub.s32 1, %s6
  %s9 = scalar_select 0, %s8, %s6
  $region1: #{tpu_custom_call.1} parent=0
    #allocation2 [shape = 'u8[8192]{0}', space=vmem, size = 0x2000, scoped, tag = 'output window, operand 0']
    #allocation3 [shape = 's32[2]{0}', space=sflag, size = 0x8, scoped, tag = 'scoped memory for tpu_custom_call.1']
    #allocation4 [shape = 'u8[8192]{0}', space=vmem, size = 0x2000, scoped, tag = 'output window, operand 1']
    #allocation5 [shape = 's32[2]{0}', space=sflag, size = 0x8, scoped, tag = 'scoped memory for tpu_custom_call.1']
    %10 = vsyncpa [#allocation3], 0
    %s11 = scalar_lea.sflag [#allocation3], 1
    %12 = vsyncpa %s11, 0
    %13 = vsyncpa [#allocation5], 0
    %s14 = scalar_lea.sflag [#allocation5], 1
    %15 = vsyncpa %s14, 0
    loop: start=0, step=1, limit=4
    $region2: #{tpu_custom_call.1} parent=1 // loop_pre_header
      _
    $region3: #{tpu_custom_call.1} parent=1 // loop_header
      %s17 = sphi 0, %s21
      %p18 = scmp.ge.s32.totalorder %s17, 4
      %s24 = sphi 0, %s36
      %s25 = sphi 0, %s32
      %s26 = sphi 0, %s24
      %s27 = sphi 0, %s25
      %s28 = sphi 0, %s26
      %s29 = sphi 0, %s27
      %s41 = sphi 0, %s43
      %s44 = sphi 0, %s41
      %s45 = sphi 0, %s44
      %s61 = sphi 0, %s45
      %s67 = sphi 0, %s69
      %s70 = sphi 0, %s67
      %s71 = sphi 0, %s70
      %s87 = sphi 0, %s71
      %s93 = sphi 0, %s95
      %s96 = sphi 0, %s93
      %s97 = sphi 0, %s96
      %s113 = sphi 0, %s97
      %s121 = sphi 0, %s123
      %s124 = sphi 0, %s121
      %s125 = sphi 0, %s124
      %s141 = sphi 0, %s125
      %s149 = sphi 0, %s151
      %s152 = sphi 0, %s149
      %s153 = sphi 0, %s152
      %s169 = sphi 0, %s153
    $region4: #{tpu_custom_call.1} parent=1 // loop_header_branch
      %20 = sbr.rel (%p18) target = $region8
    $region5: #{tpu_custom_call.1} parent=1 // loop_body
      %s22 = ssub.s32 %s17, 1
      %s23 = ssub.s32 %s17, 2
      %s30 = sadd.s32 1, %s25
      %p31 = scmp.ge.s32.totalorder %s30, 1
      %s32 = scalar_select %p31, 0, %s30
      %s33 = sadd.s32 1, %s24
      %s34 = scalar_select %p31, %s33, %s24
      %p35 = scmp.ge.s32.totalorder %s34, 2
      %s36 = scalar_select %p35, 0, %s34
      %s37 = ssub.s32 %s24, %s36
      %s38 = ssub.s32 %s25, %s32
      %s39 = sor.u32 %s37, %s38
      %p40 = scmp.eq.s32.totalorder %s39, 0
      %s42 = sadd.s32 %s41, 1
      %s43 = scalar_select %p40, %s41, %s42
      %p46 = pneg %p40
      %p47 = scmp.eq.s32.totalorder %s17, 1
      %p48 = por %p46, %p47
      %p49 = scmp.ne.s32.totalorder %s41, %s44
      %p50 = scmp.eq.s32.totalorder %s17, 0
      %p51 = por %p49, %p50
      %p52 = scmp.ne.s32.totalorder %s41, %s44
      %p53 = scmp.eq.s32.totalorder %s22, 1
      %p54 = por %p52, %p53
      %p55 = scmp.ne.s32.totalorder %s44, %s45
      %p56 = scmp.eq.s32.totalorder %s22, 0
      %p57 = por %p55, %p56
      %p58 = scmp.ne.s32.totalorder %s44, %s45
      %p59 = scmp.eq.s32.totalorder %s23, 1
      %p60 = por %p58, %p59
      %p62 = scmp.ne.s32.totalorder %s45, %s61
      %p63 = scmp.eq.s32.totalorder %s23, 0
      %p64 = por %p62, %p63
      %s65 = ssub.s32 %s24, %s36
      %p66 = scmp.eq.s32.totalorder %s65, 0
      %s68 = sadd.s32 %s67, 1
      %s69 = scalar_select %p66, %s67, %s68
      %p72 = pneg %p66
      %p73 = scmp.eq.s32.totalorder %s17, 1
      %p74 = por %p72, %p73
      %p75 = scmp.ne.s32.totalorder %s67, %s70
      %p76 = scmp.eq.s32.totalorder %s17, 0
      %p77 = por %p75, %p76
      %p78 = scmp.ne.s32.totalorder %s67, %s70
      %p79 = scmp.eq.s32.totalorder %s22, 1
      %p80 = por %p78, %p79
      %p81 = scmp.ne.s32.totalorder %s70, %s71
      %p82 = scmp.eq.s32.totalorder %s22, 0
      %p83 = por %p81, %p82
      %p84 = scmp.ne.s32.totalorder %s70, %s71
      %p85 = scmp.eq.s32.totalorder %s23, 1
      %p86 = por %p84, %p85
      %p88 = scmp.ne.s32.totalorder %s71, %s87
      %p89 = scmp.eq.s32.totalorder %s23, 0
      %p90 = por %p88, %p89
      %s91 = ssub.s32 %s24, %s36
      %p92 = scmp.eq.s32.totalorder %s91, 0
      %s94 = sadd.s32 %s93, 1
      %s95 = scalar_select %p92, %s93, %s94
      %p98 = pneg %p92
      %p99 = scmp.eq.s32.totalorder %s17, 1
      %p100 = por %p98, %p99
      %p101 = scmp.ne.s32.totalorder %s93, %s96
      %p102 = scmp.eq.s32.totalorder %s17, 0
      %p103 = por %p101, %p102
      %p104 = scmp.ne.s32.totalorder %s93, %s96
      %p105 = scmp.eq.s32.totalorder %s22, 1
      %p106 = por %p104, %p105
      %p107 = scmp.ne.s32.totalorder %s96, %s97
      %p108 = scmp.eq.s32.totalorder %s22, 0
      %p109 = por %p107, %p108
      %p110 = scmp.ne.s32.totalorder %s96, %s97
      %p111 = scmp.eq.s32.totalorder %s23, 1
      %p112 = por %p110, %p111
      %p114 = scmp.ne.s32.totalorder %s97, %s113
      %p115 = scmp.eq.s32.totalorder %s23, 0
      %p116 = por %p114, %p115
      %s117 = ssub.s32 %s24, %s36
      %s118 = ssub.s32 %s25, %s32
      %s119 = sor.u32 %s117, %s118
      %p120 = scmp.eq.s32.totalorder %s119, 0
      %s122 = sadd.s32 %s121, 1
      %s123 = scalar_select %p120, %s121, %s122
      %p126 = pneg %p120
      %p127 = scmp.eq.s32.totalorder %s17, 1
      %p128 = por %p126, %p127
      %p129 = scmp.ne.s32.totalorder %s121, %s124
      %p130 = scmp.eq.s32.totalorder %s17, 0
      %p131 = por %p129, %p130
      %p132 = scmp.ne.s32.totalorder %s121, %s124
      %p133 = scmp.eq.s32.totalorder %s22, 1
      %p134 = por %p132, %p133
      %p135 = scmp.ne.s32.totalorder %s124, %s125
      %p136 = scmp.eq.s32.totalorder %s22, 0
      %p137 = por %p135, %p136
      %p138 = scmp.ne.s32.totalorder %s124, %s125
      %p139 = scmp.eq.s32.totalorder %s23, 1
      %p140 = por %p138, %p139
      %p142 = scmp.ne.s32.totalorder %s125, %s141
      %p143 = scmp.eq.s32.totalorder %s23, 0
      %p144 = por %p142, %p143
      %s145 = ssub.s32 %s24, %s36
      %s146 = ssub.s32 %s25, %s32
      %s147 = sor.u32 %s145, %s146
      %p148 = scmp.eq.s32.totalorder %s147, 0
      %s150 = sadd.s32 %s149, 1
      %s151 = scalar_select %p148, %s149, %s150
      %p154 = pneg %p148
      %p155 = scmp.eq.s32.totalorder %s17, 1
      %p156 = por %p154, %p155
      %p157 = scmp.ne.s32.totalorder %s149, %s152
      %p158 = scmp.eq.s32.totalorder %s17, 0
      %p159 = por %p157, %p158
      %p160 = scmp.ne.s32.totalorder %s149, %s152
      %p161 = scmp.eq.s32.totalorder %s22, 1
      %p162 = por %p160, %p161
      %p163 = scmp.ne.s32.totalorder %s152, %s153
      %p164 = scmp.eq.s32.totalorder %s22, 0
      %p165 = por %p163, %p164
      %p166 = scmp.ne.s32.totalorder %s152, %s153
      %p167 = scmp.eq.s32.totalorder %s23, 1
      %p168 = por %p166, %p167
      %p170 = scmp.ne.s32.totalorder %s153, %s169
      %p171 = scmp.eq.s32.totalorder %s23, 0
      %p172 = por %p170, %p171
      %p173 = scmp.le.s32.totalorder 1, %s17
      %p174 = scmp.lt.s32.totalorder %s17, 3
      %p175 = pnand %p173, %p174
      %p176 = pneg %p175
      // Predicated region
      $region9: #{tpu_custom_call.1} parent=5 // pred_check
        _
      $region10: #{tpu_custom_call.1} parent=5 // pred_check_branch
        %178 = sbr.rel (%p175) target = $region12
      $region11: #{tpu_custom_call.1} parent=5 // pred_region
        %s179 = ssub.s32 %s17, 1
      $region12: #{tpu_custom_call.1} parent=5 // pred_fallthru
        _
      %p180 = scmp.lt.s32.totalorder %s17, 2
      // Predicated region
      $region13: #{tpu_custom_call.1} parent=5 // pred_check
        %p181 = pneg %p180
      $region14: #{tpu_custom_call.1} parent=5 // pred_check_branch
        %183 = sbr.rel (%p181) target = $region16
      $region15: #{tpu_custom_call.1} parent=5 // pred_region
        // Predicated region
        $region17: #{tpu_custom_call.1} parent=15 // pred_check
          %p184 = pneg %p51
        $region18: #{tpu_custom_call.1} parent=15 // pred_check_branch
          %186 = sbr.rel (%p184) target = $region20
        $region19: #{tpu_custom_call.1} parent=15 // pred_region
          %p187 = scmp.lt.s32.totalorder %s24, 1
          %s188 = scalar_select %p187, %s24, 1
          %p189 = scmp.lt.s32.totalorder %s25, 0
          %s190 = scalar_select %p189, %s25, 0
          %s191 = sadd.s32 %s190, %s188
          %s192 = smul.addr %s191, 8
          %s193 = scalar_lea.vmem %s0, %s192
        $region20: #{tpu_custom_call.1} parent=15 // pred_fallthru
          _
        // Predicated region
        $region21: #{tpu_custom_call.1} parent=15 // pred_check
          %p194 = pneg %p77
        $region22: #{tpu_custom_call.1} parent=15 // pred_check_branch
          %196 = sbr.rel (%p194) target = $region24
        $region23: #{tpu_custom_call.1} parent=15 // pred_region
          %p197 = scmp.lt.s32.totalorder %s24, 1
          %s198 = scalar_select %p197, %s24, 1
          %s199 = smul.addr %s198, 4
          %s200 = smul.addr %s199, 8
          %s201 = scalar_lea.vmem %s1, %s200
        $region24: #{tpu_custom_call.1} parent=15 // pred_fallthru
          _
        // Predicated region
        $region25: #{tpu_custom_call.1} parent=15 // pred_check
          %p202 = pneg %p103
        $region26: #{tpu_custom_call.1} parent=15 // pred_check_branch
          %204 = sbr.rel (%p202) target = $region28
        $region27: #{tpu_custom_call.1} parent=15 // pred_region
          %p205 = scmp.lt.s32.totalorder %s24, 1
          %s206 = scalar_select %p205, %s24, 1
          %s207 = smul.addr %s206, 2
          %s208 = smul.addr %s207, 8
          %s209 = scalar_lea.vmem %s2, %s208
        $region28: #{tpu_custom_call.1} parent=15 // pred_fallthru
          _
      $region16: #{tpu_custom_call.1} parent=5 // pred_fallthru
        _
      %p210 = scmp.le.s32.totalorder 1, %s17
      %p211 = scmp.lt.s32.totalorder %s17, 3
      %p212 = pnand %p210, %p211
      %p213 = pneg %p212
      // Predicated region
      $region29: #{tpu_custom_call.1} parent=5 // pred_check
        _
      $region30: #{tpu_custom_call.1} parent=5 // pred_check_branch
        %215 = sbr.rel (%p212) target = $region32
      $region31: #{tpu_custom_call.1} parent=5 // pred_region
        %s216 = ssub.s32 %s17, 1
        %p217 = scmp.lt.s32.totalorder %s26, 1
        %s218 = scalar_select %p217, %s26, 1
        %p219 = scmp.lt.s32.totalorder %s27, 0
        %s220 = scalar_select %p219, %s27, 0
        %s221 = sadd.s32 %s220, %s218
        %s222 = smul.addr %s221, 8
        %s223 = scalar_lea.vmem %s0, %s222
        %p224 = pneg %p57
        %p225 = pneg %p54
        %p226 = scmp.lt.s32.totalorder %s26, 1
        %s227 = scalar_select %p226, %s26, 1
        %s228 = smul.addr %s227, 4
        %s229 = smul.addr %s228, 8
        %s230 = scalar_lea.vmem %s1, %s229
        %p231 = pneg %p83
        %p232 = pneg %p80
        %p233 = scmp.lt.s32.totalorder %s26, 1
        %s234 = scalar_select %p233, %s26, 1
        %s235 = smul.addr %s234, 2
        %s236 = smul.addr %s235, 8
        %s237 = scalar_lea.vmem %s2, %s236
        %p238 = pneg %p109
        %p239 = pneg %p106
        %p240 = pneg %p137
        %p241 = pneg %p134
        %s242 = sand.u32 %s124, 1
        %s243 = scalar_lea.sflag [#allocation3], %s242
        %s244 = sand.u32 %s124, 1
        %s245 = smul.addr %s244, 8
        %s246 = scalar_lea.vmem [#allocation2], %s245
        %p247 = pneg %p165
        %p248 = pneg %p162
        %s249 = sand.u32 %s152, 1
        %s250 = scalar_lea.sflag [#allocation5], %s249
        %s251 = sand.u32 %s152, 1
        %s252 = smul.addr %s251, 8
        %s253 = scalar_lea.vmem [#allocation4], %s252
        %p254 = scmp.lt.s32.totalorder %s26, 1
        %s255 = scalar_select %p254, %s26, 1
        %p256 = scmp.lt.s32.totalorder %s27, 0
        %s257 = scalar_select %p256, %s27, 0
        %s258 = sadd.s32 %s257, %s255
        %s259 = smul.addr %s258, 8
        %s260 = scalar_lea.vmem %s0, %s259
        %p261 = scmp.lt.s32.totalorder %s26, 1
        %s262 = scalar_select %p261, %s26, 1
        %s263 = smul.addr %s262, 4
        %s264 = smul.addr %s263, 8
        %s265 = scalar_lea.vmem %s1, %s264
        %p266 = scmp.lt.s32.totalorder %s26, 1
        %s267 = scalar_select %p266, %s26, 1
        %s268 = smul.addr %s267, 2
        %s269 = smul.addr %s268, 8
        %s270 = scalar_lea.vmem %s2, %s269
        %v271 = vld [vmem:[%s260] sm:$0xff]
        %v272 = vld [vmem:[%s265] sm:$0xff]
        %v273 = vld [vmem:[%s265 + $0x8] sm:$0xff]
        %v274 = vld [vmem:[%s265 + $0x10] sm:$0xff]
        %v275 = vld [vmem:[%s265 + $0x18] sm:$0xff]
        %v276 = vld [vmem:[%s270] sm:$0xff]
        %v277 = vld [vmem:[%s270 + $0x8] sm:$0xff]
        %vm278 = vcmask 261120
        %v280 = vsel %vm278, %v271, 0
        %282 = vmatprep.subr.mxu0 0.0
        %283 = vmatpush1.msra.mxu0 0.0
        %284 = vmatprep.subr.mxu0 0.0
        %285 = vmatpush1.msra.mxu0 0.0
        %286 = vmatprep.subr.mxu0 0.0
        %287 = vmatpush1.msra.mxu0 0.0
        %288 = vmatprep.subr.mxu0 0.0
        %289 = vmatpush1.msra.mxu0 0.0
        %290 = vmatprep.subr.mxu0 0.0
        %291 = vmatpush1.msra.mxu0 0.0
        %292 = vmatprep.subr.mxu0 0.0
        %293 = vmatpush1.msra.mxu0 0.0
        %294 = vmatprep.subr.mxu0 0.0
        %295 = vmatpush1.msra.mxu0 0.0
        %296 = vmatprep.subr.mxu0 0.0
        %297 = vmatpush1.msra.mxu0 0.0
        %298 = vmatprep.subr.mxu0 0.0
        %299 = vmatpush1.msra.mxu0 0.0
        %300 = vmatprep.subr.mxu0 0.0
        %301 = vmatpush1.msra.mxu0 0.0
        %302 = vmatprep.subr.mxu0 0.0
        %303 = vmatpush1.msra.mxu0 0.0
        %304 = vmatprep.subr.mxu0 0.0
        %305 = vmatpush1.msra.mxu0 0.0
        %306 = vmatprep.subr.mxu0 0.0
        %307 = vmatpush1.msra.mxu0 %v275
        %308 = vmatprep.subr.mxu0 0.0
        %309 = vmatpush1.msra.mxu0 %v274
        %310 = vmatprep.subr.mxu0 0.0
        %311 = vmatpush1.msra.mxu0 %v273
        %312 = vmatprep.subr.mxu0 0.0
        %313 = vmatpush1.msra.mxu0 %v272
        %314 = vmatprep.subr.mxu0 0.0
        %315 = vmatpush2.msra.mxu0 0.0
        %316 = vmatprep.subr.mxu0 0.0
        %317 = vmatpush2.msra.mxu0 0.0
        %318 = vmatprep.subr.mxu0 0.0
        %319 = vmatpush2.msra.mxu0 0.0
        %320 = vmatprep.subr.mxu0 0.0
        %321 = vmatpush2.msra.mxu0 0.0
        %322 = vmatprep.subr.mxu0 0.0
        %323 = vmatpush2.msra.mxu0 0.0
        %324 = vmatprep.subr.mxu0 0.0
        %325 = vmatpush2.msra.mxu0 0.0
        %326 = vmatprep.subr.mxu0 0.0
        %327 = vmatpush2.msra.mxu0 0.0
        %328 = vmatprep.subr.mxu0 0.0
        %329 = vmatpush2.msra.mxu0 0.0
        %330 = vmatprep.subr.mxu0 0.0
        %331 = vmatpush2.msra.mxu0 0.0
        %332 = vmatprep.subr.mxu0 0.0
        %333 = vmatpush2.msra.mxu0 0.0
        %334 = vmatprep.subr.mxu0 0.0
        %335 = vmatpush2.msra.mxu0 0.0
        %336 = vmatprep.subr.mxu0 0.0
        %337 = vmatpush2.msra.mxu0 0.0
        %338 = vmatprep.subr.mxu0 0.0
        %339 = vmatpush2.msra.mxu0 0.0
        %340 = vmatprep.subr.mxu0 0.0
        %341 = vmatpush2.msra.mxu0 0.0
        %342 = vmatprep.subr.mxu0 0.0
        %343 = vmatpush2.msra.mxu0 0.0
        %344 = vmatprep.subr.mxu0 0.0
        %345 = vmatpush2.msra.mxu0 0.0
        %346 = vmatprep.mubr.f32.mxu0 0.0
        %347 = vmatmul.mubr.f32.gmra.mxu0 %v280
        %v348 = vpop.f32.mrf.mxu0
        %v349 = vadd.f32 0.0, %v348
        %v350 = vpop.f32.mrf.mxu0
        %351 = vdwg.mxu0
        %v352 = vmul.f32 %v349, 0.17677669
        %vm353 = vcmask 130048
        %v354 = vsel %vm353, %v352, -inf
        %355 = vmax.xlane.f32.xlu0 %v354
        %v356 = vpop.xlane.xlu0 %355
        %v357 = vsub.f32 %v352, %v356
        %v358 = vmul.f32 %v357, 1.442695
        %v359 = vpow.pop %v358
        %v360 = vsel %vm353, %v359, 0.0
        %361 = vadd.xlane.f32.xlu0 %v360
        %v362 = vpop.xlane.xlu0 %361
        %v363 = vrcp.pop %v362
        %v364 = vlaneseq
        %v365 = vand.u32 %v364, 127
        %v367 = vshra.s32 %v359, 4
        %v368 = vshll.u32 %v367, 4
        %v369 = vsub.s32 15, %v365
        %v370 = vor.u32 %v368, %v369
        %v371 = vsel %vm353, %v370, 2147483648
        %v372 = vand.u32 %v371, 65535
        %v373 = vshra.s32 %v371, 16
        %v374 = vcvt.s32.f32 %v372
        %v375 = vcvt.s32.f32 %v373
        %376 = vmax.xlane.f32.xlu0 %v375
        %v377 = vpop.xlane.xlu0 %376
        %vm378 = vcmp.eq.f32.partialorder %v375, %v377
        %v379 = vsel %vm378, %v374, -inf
        %380 = vmax.xlane.f32.xlu0 %v379
        %v381 = vpop.xlane.xlu0 %380
        %v382 = vcvt.f32.s32 %v381
        %v383 = vcvt.f32.s32 %v377
        %v384 = vshll.u32 %v383, 16
        %v385 = vadd.s32 %v384, %v382
        %vm386 = vcmp.eq.s32.totalorder %v370, %v385
        %v387 = vsel %vm386, 2147483648, %v370
        %v388 = vsel %vm353, %v387, 2147483648
        %v389 = vand.u32 %v388, 65535
        %v390 = vshra.s32 %v388, 16
        %v391 = vcvt.s32.f32 %v389
        %v392 = vcvt.s32.f32 %v390
        %393 = vmax.xlane.f32.xlu0 %v392
        %v394 = vpop.xlane.xlu0 %393
        %vm395 = vcmp.eq.f32.partialorder %v392, %v394
        %v396 = vsel %vm395, %v391, -inf
        %397 = vmax.xlane.f32.xlu0 %v396
        %v398 = vpop.xlane.xlu0 %397
        %v399 = vcvt.f32.s32 %v398
        %v400 = vcvt.f32.s32 %v394
        %v401 = vshll.u32 %v400, 16
        %v402 = vadd.s32 %v401, %v399
        %vm403 = vcmp.eq.s32.totalorder %v387, %v402
        %v404 = vsel %vm403, 2147483648, %v387
        %v405 = vsel %vm353, %v404, 2147483648
        %v406 = vand.u32 %v405, 65535
        %v407 = vshra.s32 %v405, 16
        %v408 = vcvt.s32.f32 %v406
        %v409 = vcvt.s32.f32 %v407
        %410 = vmax.xlane.f32.xlu0 %v409
        %v411 = vpop.xlane.xlu0 %410
        %vm412 = vcmp.eq.f32.partialorder %v409, %v411
        %v413 = vsel %vm412, %v408, -inf
        %414 = vmax.xlane.f32.xlu0 %v413
        %v415 = vpop.xlane.xlu0 %414
        %v416 = vcvt.f32.s32 %v415
        %v417 = vcvt.f32.s32 %v411
        %v418 = vshll.u32 %v417, 16
        %v419 = vadd.s32 %v418, %v416
        %vm420 = vcmp.eq.s32.totalorder %v404, %v419
        %v421 = vsel %vm420, 2147483648, %v404
        %v422 = vsel %vm353, %v421, 2147483648
        %v423 = vand.u32 %v422, 65535
        %v424 = vshra.s32 %v422, 16
        %v425 = vcvt.s32.f32 %v423
        %v426 = vcvt.s32.f32 %v424
        %427 = vmax.xlane.f32.xlu0 %v426
        %v428 = vpop.xlane.xlu0 %427
        %vm429 = vcmp.eq.f32.partialorder %v426, %v428
        %v430 = vsel %vm429, %v425, -inf
        %431 = vmax.xlane.f32.xlu0 %v430
        %v432 = vpop.xlane.xlu0 %431
        %v433 = vcvt.f32.s32 %v432
        %v434 = vcvt.f32.s32 %v428
        %v435 = vshll.u32 %v434, 16
        %v436 = vadd.s32 %v435, %v433
        %vm437 = vcmp.eq.s32.totalorder %v421, %v436
        %v438 = vsel %vm437, 2147483648, %v421
        %v439 = vsel %vm353, %v438, 2147483648
        %v440 = vand.u32 %v439, 65535
        %v441 = vshra.s32 %v439, 16
        %v442 = vcvt.s32.f32 %v440
        %v443 = vcvt.s32.f32 %v441
        %444 = vmax.xlane.f32.xlu0 %v443
        %v445 = vpop.xlane.xlu0 %444
        %vm446 = vcmp.eq.f32.partialorder %v443, %v445
        %v447 = vsel %vm446, %v442, -inf
        %448 = vmax.xlane.f32.xlu0 %v447
        %v449 = vpop.xlane.xlu0 %448
        %v450 = vcvt.f32.s32 %v449
        %v451 = vcvt.f32.s32 %v445
        %v452 = vshll.u32 %v451, 16
        %v453 = vadd.s32 %v452, %v450
        %v454 = vshra.s32 %v453, 4
        %v455 = vshll.u32 %v454, 4
        %v457 = vsub.f32 %v359, %v455
        %v458 = vmul.f32 %v457, %v363
        %v459 = vsub.f32 %v458, 1e-07
        %v460 = vmax.f32 %v459, 0.0
        %v461 = vsel %vm353, %v460, 0.0
        %462 = vadd.xlane.f32.xlu0 %v461
        %v463 = vpop.xlane.xlu0 %462
        %v464 = vadd.f32 %v463, 1e-07
        %v465 = vrcp.pop %v464
        %v466 = vmul.f32 %v460, %v465
        %v468 = vsel %vm353, %v466, 0
        %470 = vmatprep.subr.mxu0 0.0
        %471 = vmatpush1.msra.mxu0 0.0
        %472 = vmatprep.subr.mxu0 0.0
        %473 = vmatpush1.msra.mxu0 0.0
        %474 = vmatprep.subr.mxu0 0.0
        %475 = vmatpush1.msra.mxu0 0.0
        %476 = vmatprep.subr.mxu0 0.0
        %477 = vmatpush1.msra.mxu0 0.0
        %478 = vmatprep.subr.mxu0 0.0
        %479 = vmatpush1.msra.mxu0 0.0
        %480 = vmatprep.subr.mxu0 0.0
        %481 = vmatpush1.msra.mxu0 0.0
        %482 = vmatprep.subr.mxu0 0.0
        %483 = vmatpush1.msra.mxu0 0.0
        %484 = vmatprep.subr.mxu0 0.0
        %485 = vmatpush1.msra.mxu0 0.0
        %486 = vmatprep.subr.mxu0 0.0
        %487 = vmatpush1.msra.mxu0 0.0
        %488 = vmatprep.subr.mxu0 0.0
        %489 = vmatpush1.msra.mxu0 0.0
        %490 = vmatprep.subr.mxu0 0.0
        %491 = vmatpush1.msra.mxu0 0.0
        %492 = vmatprep.subr.mxu0 0.0
        %493 = vmatpush1.msra.mxu0 0.0
        %494 = vmatprep.subr.mxu0 0.0
        %495 = vmatpush1.msra.mxu0 0.0
        %496 = vmatprep.subr.mxu0 0.0
        %497 = vmatpush1.msra.mxu0 0.0
        %498 = vmatprep.subr.mxu0 0.0
        %499 = vmatpush1.msra.mxu0 %v277
        %500 = vmatprep.subr.mxu0 0.0
        %501 = vmatpush1.msra.mxu0 %v276
        %502 = vmatprep.subr.mxu0 0.0
        %503 = vmatpush2.msra.mxu0 0.0
        %504 = vmatprep.subr.mxu0 0.0
        %505 = vmatpush2.msra.mxu0 0.0
        %506 = vmatprep.subr.mxu0 0.0
        %507 = vmatpush2.msra.mxu0 0.0
        %508 = vmatprep.subr.mxu0 0.0
        %509 = vmatpush2.msra.mxu0 0.0
        %510 = vmatprep.subr.mxu0 0.0
        %511 = vmatpush2.msra.mxu0 0.0
        %512 = vmatprep.subr.mxu0 0.0
        %513 = vmatpush2.msra.mxu0 0.0
        %514 = vmatprep.subr.mxu0 0.0
        %515 = vmatpush2.msra.mxu0 0.0
        %516 = vmatprep.subr.mxu0 0.0
        %517 = vmatpush2.msra.mxu0 0.0
        %518 = vmatprep.subr.mxu0 0.0
        %519 = vmatpush2.msra.mxu0 0.0
        %520 = vmatprep.subr.mxu0 0.0
        %521 = vmatpush2.msra.mxu0 0.0
        %522 = vmatprep.subr.mxu0 0.0
        %523 = vmatpush2.msra.mxu0 0.0
        %524 = vmatprep.subr.mxu0 0.0
        %525 = vmatpush2.msra.mxu0 0.0
        %526 = vmatprep.subr.mxu0 0.0
        %527 = vmatpush2.msra.mxu0 0.0
        %528 = vmatprep.subr.mxu0 0.0
        %529 = vmatpush2.msra.mxu0 0.0
        %530 = vmatprep.subr.mxu0 0.0
        %531 = vmatpush2.msra.mxu0 0.0
        %532 = vmatprep.subr.mxu0 0.0
        %533 = vmatpush2.msra.mxu0 0.0
        %534 = vmatprep.mubr.f32.mxu0 0.0
        %535 = vmatmul.mubr.f32.gmra.mxu0 %v468
        %v536 = vpop.f32.mrf.mxu0
        %v537 = vadd.f32 0.0, %v536
        %v538 = vpop.f32.mrf.mxu0
        %539 = vdwg.mxu0
        %540 = vst [vmem:[%s246] sm:$0xff] %v537
        %541 = vst.msk [vmem:[%s253] sm:$0xff] %vm353, %v466
        %s542 = sand.u32 %s124, 1
        %s543 = scalar_lea.sflag [#allocation3], %s542
        %s544 = sand.u32 %s124, 1
        %s545 = smul.addr %s544, 8
        %s546 = scalar_lea.vmem [#allocation2], %s545
        %s547 = sand.u32 %s152, 1
        %s548 = scalar_lea.sflag [#allocation5], %s547
        %s549 = sand.u32 %s152, 1
        %s550 = smul.addr %s549, 8
        %s551 = scalar_lea.vmem [#allocation4], %s550
        // Predicated region
        $region33: #{tpu_custom_call.1} parent=31 // pred_check
          %p552 = pneg %p134
        $region34: #{tpu_custom_call.1} parent=31 // pred_check_branch
          %554 = sbr.rel (%p552) target = $region36
        $region35: #{tpu_custom_call.1} parent=31 // pred_region
          %s556 = ssub.s32 128, 128
          %557 = vsyncadd %s543, %s556
          %s558 = sadd.s32 %s27, %s26
          %s559 = smul.addr %s558, 128
          %s560 = scalar_lea.hbm %s3, %s559
          %s562 = sshll.u32 %s546, 4
          %s563 = int_to_ptr.vmem [resolvable:$true] %s562
          %565 = dma.vmem_to_hbm [thread:$0]  %s563, 128, %s560, %s543
        $region36: #{tpu_custom_call.1} parent=31 // pred_fallthru
          _
        // Predicated region
        $region37: #{tpu_custom_call.1} parent=31 // pred_check
          %p566 = pneg %p162
        $region38: #{tpu_custom_call.1} parent=31 // pred_check_branch
          %568 = sbr.rel (%p566) target = $region40
        $region39: #{tpu_custom_call.1} parent=31 // pred_region
          %s570 = ssub.s32 128, 128
          %571 = vsyncadd %s548, %s570
          %s572 = sadd.s32 %s27, %s26
          %s573 = smul.addr %s572, 128
          %s574 = scalar_lea.hbm %s4, %s573
          %s576 = sshll.u32 %s551, 4
          %s577 = int_to_ptr.vmem [resolvable:$true] %s576
          %579 = dma.vmem_to_hbm [thread:$0]  %s577, 128, %s574, %s548
        $region40: #{tpu_custom_call.1} parent=31 // pred_fallthru
          _
      $region32: #{tpu_custom_call.1} parent=5 // pred_fallthru
        _
      %p580 = scmp.le.s32.totalorder 2, %s17
      // Predicated region
      $region41: #{tpu_custom_call.1} parent=5 // pred_check
        %p581 = pneg %p580
      $region42: #{tpu_custom_call.1} parent=5 // pred_check_branch
        %583 = sbr.rel (%p581) target = $region44
      $region43: #{tpu_custom_call.1} parent=5 // pred_region
        %s584 = ssub.s32 %s17, 2
        // Predicated region
        $region45: #{tpu_custom_call.1} parent=43 // pred_check
          %p585 = pneg %p140
        $region46: #{tpu_custom_call.1} parent=43 // pred_check_branch
          %587 = sbr.rel (%p585) target = $region48
        $region47: #{tpu_custom_call.1} parent=43 // pred_region
          %s588 = sand.u32 %s125, 1
          %s589 = scalar_lea.sflag [#allocation3], %s588
          %s590 = sand.u32 %s125, 1
          %s591 = smul.addr %s590, 8
          %s592 = scalar_lea.vmem [#allocation2], %s591
          %593 = dma.done %s589, 128
        $region48: #{tpu_custom_call.1} parent=43 // pred_fallthru
          _
        // Predicated region
        $region49: #{tpu_custom_call.1} parent=43 // pred_check
          %p594 = pneg %p168
        $region50: #{tpu_custom_call.1} parent=43 // pred_check_branch
          %596 = sbr.rel (%p594) target = $region52
        $region51: #{tpu_custom_call.1} parent=43 // pred_region
          %s597 = sand.u32 %s153, 1
          %s598 = scalar_lea.sflag [#allocation5], %s597
          %s599 = sand.u32 %s153, 1
          %s600 = smul.addr %s599, 8
          %s601 = scalar_lea.vmem [#allocation4], %s600
          %602 = dma.done %s598, 128
        $region52: #{tpu_custom_call.1} parent=43 // pred_fallthru
          _
      $region44: #{tpu_custom_call.1} parent=5 // pred_fallthru
        _
    $region6: #{tpu_custom_call.1} parent=1 // loop_footer
      %s21 = sadd.s32 1, %s17
    $region7: #{tpu_custom_call.1} parent=1 // loop_footer_branch
      %16 = sbr.rel target = $region3
    $region8: #{tpu_custom_call.1} parent=1 // loop_exit
      _
    %603 = vsyncpa [#allocation3], 1
    %s604 = scalar_lea.sflag [#allocation3], 1
    %605 = vsyncpa %s604, 1
    %606 = vsyncpa [#allocation5], 1
    %s607 = scalar_lea.sflag [#allocation5], 1
    %608 = vsyncpa %s607, 1

</llo_original>
